<compile_context>
chip_gen: v5e
topology: v5e:2x2
jax: 0.10.0
libtpu: 0.0.40
codegen_flags: <defaults>
</compile_context>

<pallas_src>
import math

import jax
import jax.numpy as jnp
from jax.experimental import pallas as pl
from jax.experimental.pallas import tpu as pltpu


_BLOCK_BUDGET_BYTES = 2 * 1024 * 1024   # target bytes per x block (single buffer)
_VMEM_LIMIT_BYTES = 32 * 1024 * 1024    # safe scoped limit on v5e / v6e / v7x


def _round_up(x: int, m: int) -> int:
    return -(-x // m) * m


def _add_pe_kernel(x_ref, pe_ref, out_ref):
    # pe block broadcasts over the leading (batch) dim of the x block.
    # In-kernel cast is free on the VPU and hidden under the HBM DMA.
    out_ref[...] = x_ref[...] + pe_ref[...].astype(x_ref.dtype)


def make_sinusoidal_pe(max_seq_len: int, d_model: int, dtype=jnp.float32) -> jax.Array:
    """(max_seq_len, d_model) sinusoidal table — same formula as the PyTorch buffer.

    Store it once in the compute dtype (register_buffer equivalent) so the forward
    never has to cast / copy the table through HBM again.
    """
    position = jnp.arange(max_seq_len, dtype=jnp.float32)[:, None]            # (L, 1)
    div_term = jnp.exp(jnp.arange(0, d_model, 2, dtype=jnp.float32)
                       * (-math.log(10000.0) / d_model))                      # (d/2,)
    angles = position * div_term                                              # (L, d/2)
    pe = jnp.zeros((max_seq_len, d_model), dtype=jnp.float32)
    pe = pe.at[:, 0::2].set(jnp.sin(angles))
    pe = pe.at[:, 1::2].set(jnp.cos(angles))
    return pe.astype(dtype)


def _forward_native_3d(x: jax.Array, pe_table: jax.Array) -> jax.Array:
    """d_model % 128 == 0 path: (B, S, D) blocking, pe stays (max_L, D)."""
    B, S, D = x.shape
    itemsize = jnp.dtype(x.dtype).itemsize

    # Sequence-row tile (sublane dim): multiple of 8, or the full S.
    ts = S if S <= 512 else 512
    ts_pad = max(8, _round_up(min(ts, S), 8))

    # Batch tile sized by the per-block VMEM budget; make it divide B so the
    # leading block dim is never ragged.
    tb = max(1, _BLOCK_BUDGET_BYTES // (ts_pad * D * itemsize))
    tb = min(tb, B)
    while B % tb:
        tb -= 1

    grid = (pl.cdiv(B, tb), pl.cdiv(S, ts))

    cost = pl.CostEstimate(
        flops=B * S * D,
        transcendentals=0,
        bytes_accessed=(2 * B * S * D + S * D) * itemsize,
    )

    return pl.pallas_call(
        _add_pe_kernel,
        out_shape=jax.ShapeDtypeStruct((B, S, D), x.dtype),
        grid_spec=pltpu.PrefetchScalarGridSpec(
            num_scalar_prefetch=0,
            grid=grid,
            in_specs=[
                pl.BlockSpec((tb, ts, D), lambda i, j: (i, j, 0)),   # x tile
                # pe[:S] is expressed purely by the seq grid axis — no slice copy.
                pl.BlockSpec((ts, D), lambda i, j: (j, 0)),
            ],
            out_specs=pl.BlockSpec((tb, ts, D), lambda i, j: (i, j, 0)),
        ),
        compiler_params=pltpu.CompilerParams(
            dimension_semantics=("parallel", "parallel"),
            vmem_limit_bytes=_VMEM_LIMIT_BYTES,
        ),
        cost_estimate=cost,
    )(x, pe_table)


def _forward_flat_2d(x: jax.Array, pe_table: jax.Array) -> jax.Array:
    """d_model % 128 != 0 path: lane-dense (B, S*D) slabs (unmasked full-lane stores)."""
    B, S, D = x.shape
    itemsize = jnp.dtype(x.dtype).itemsize
    C = S * D

    x2 = x.reshape(B, C)                      # contiguous -> free reshape

    # Row tile (sublane dim): full B if small, else 256-row blocks (divides B).
    tb = B if B <= 256 else 256
    while B % tb:
        tb -= 1
    tb_pad = max(8, _round_up(tb, 8))         # budget accounts for sublane padding

    # Column tile from the VMEM budget, multiple of 128 lanes.
    tc = max(128, (_BLOCK_BUDGET_BYTES // (tb_pad * itemsize)) // 128 * 128)

    if C % 128 == 0:
        # Full-table flat view (free, contiguous): pe[:S] is the first C columns,
        # selected purely by the column grid — no per-call slice / cast copy.
        pe2 = pe_table.reshape(1, -1)
        tc = min(tc, C)
        grid = (pl.cdiv(B, tb), pl.cdiv(C, tc))
    else:
        # Odd C: a single full-width column block (last block dim must equal the
        # full array dim when not a 128 multiple); tiny pe slice copy is unavoidable.
        pe2 = pe_table[:S].reshape(1, C)
        tc = C
        max_rows = max(1, _BLOCK_BUDGET_BYTES // (C * itemsize))
        if tb > max_rows:
            tb = max(1, (max_rows // 8) * 8)
            while B % tb:
                tb -= 1
        grid = (pl.cdiv(B, tb), 1)

    cost = pl.CostEstimate(
        flops=B * C,
        transcendentals=0,
        bytes_accessed=(2 * B * C + C) * itemsize,
    )

    out2 = pl.pallas_call(
        _add_pe_kernel,
        out_shape=jax.ShapeDtypeStruct((B, C), x.dtype),
        grid_spec=pltpu.PrefetchScalarGridSpec(
            num_scalar_prefetch=0,
            grid=grid,
            in_specs=[
                pl.BlockSpec((tb, tc), lambda i, j: (i, j)),   # x row/col slab
                pl.BlockSpec((1, tc), lambda i, j: (0, j)),    # matching pe columns
            ],
            out_specs=pl.BlockSpec((tb, tc), lambda i, j: (i, j)),
        ),
        compiler_params=pltpu.CompilerParams(
            dimension_semantics=("parallel", "parallel"),
            vmem_limit_bytes=_VMEM_LIMIT_BYTES,
        ),
        cost_estimate=cost,
    )(x2, pe2)

    return out2.reshape(B, S, D)


def sinusoidal_positional_encoding(x: jax.Array, pe_table: jax.Array) -> jax.Array:
    """out[b, s, :] = x[b, s, :] + pe_table[s, :]  (PyTorch forward semantics)."""
    B, S, D = x.shape
    assert pe_table.shape[0] >= S and pe_table.shape[1] == D
    if D % 128 == 0:
        return _forward_native_3d(x, pe_table)
    return _forward_flat_2d(x, pe_table)


if __name__ == "__main__":
    key = jax.random.PRNGKey(0)
    fwd = jax.jit(sinusoidal_positional_encoding)

    # --- primary check: shapes implied by the module (d_model < 128 -> flat path) ---
    batch, seq_len, d_model, max_seq_len = 2, 8, 32, 64
    x = jax.random.normal(key, (batch, seq_len, d_model), dtype=jnp.float32)
    pe_table = make_sinusoidal_pe(max_seq_len, d_model, dtype=jnp.float32)

    out = jax.block_until_ready(fwd(x, pe_table))
    ref = x + pe_table[:seq_len][None, :, :]
    assert out.shape == (batch, seq_len, d_model)
    assert jnp.allclose(out, ref, atol=1e-6), "mismatch vs reference (flat path)"

    # --- secondary check: d_model % 128 == 0 exercises the native 3-D path ---
    k2 = jax.random.PRNGKey(0)
    b2, s2, d2, l2 = 2, 16, 128, 64
    x2 = jax.random.normal(k2, (b2, s2, d2), dtype=jnp.float32)
    pe2 = make_sinusoidal_pe(l2, d2, dtype=jnp.float32)
    out2 = jax.block_until_ready(fwd(x2, pe2))
    ref2 = x2 + pe2[:s2][None, :, :]
    assert jnp.allclose(out2, ref2, atol=1e-6), "mismatch vs reference (3-D path)"

    print("KERNEL_OK")
</pallas_src>

<mosaic_0001>
module attributes {stable_mosaic.version = 11 : i64} {
  func.func @_add_pe_kernel(%arg0: i32, %arg1: i32, %arg2: memref<2x256xf32, #tpu.memory_space<vmem>>, %arg3: memref<1x256xf32, #tpu.memory_space<vmem>>, %arg4: memref<2x256xf32, #tpu.memory_space<vmem>>) attributes {dimension_semantics = [#tpu.dimension_semantics<parallel>, #tpu.dimension_semantics<parallel>], iteration_bounds = array<i64: 1, 1>, scalar_prefetch = 0 : i64, scratch_operands = 0 : i64, tpu.core_type = #tpu.core_type<tc>, window_params = [{transform_indices = @transform_0, window_bounds = array<i64: 2, 256>}, {transform_indices = @transform_1, window_bounds = array<i64: 1, 256>}, {transform_indices = @transform_2, window_bounds = array<i64: 2, 256>}]} {
    %c0 = arith.constant 0 : index
    %c0_0 = arith.constant 0 : index
    %0 = vector.load %arg2[%c0, %c0_0] : memref<2x256xf32, #tpu.memory_space<vmem>>, vector<2x256xf32>
    %c0_1 = arith.constant 0 : index
    %c0_2 = arith.constant 0 : index
    %1 = vector.load %arg3[%c0_1, %c0_2] : memref<1x256xf32, #tpu.memory_space<vmem>>, vector<1x256xf32>
    %2 = vector.broadcast %1 : vector<1x256xf32> to vector<2x256xf32>
    %3 = arith.addf %0, %2 : vector<2x256xf32>
    %c0_3 = arith.constant 0 : index
    %c0_4 = arith.constant 0 : index
    %4 = vector.load %arg4[%c0_3, %c0_4] : memref<2x256xf32, #tpu.memory_space<vmem>>, vector<2x256xf32>
    tpu.vector_store %arg4[%c0_3, %c0_4], %3 {strides = array<i32>} : memref<2x256xf32, #tpu.memory_space<vmem>>, vector<2x256xf32>,
    return
  }
  func.func @transform_0(%arg0: i32, %arg1: i32) -> (i32, i32) {
    %c0_i32 = arith.constant 0 : i32
    return %arg0, %arg1 : i32, i32
  }
  func.func @transform_1(%arg0: i32, %arg1: i32) -> (i32, i32) {
    %c0_i32 = arith.constant 0 : i32
    %c0_i32_0 = arith.constant 0 : i32
    return %c0_i32, %arg1 : i32, i32
  }
  func.func @transform_2(%arg0: i32, %arg1: i32) -> (i32, i32) {
    %c0_i32 = arith.constant 0 : i32
    return %arg0, %arg1 : i32, i32
  }
}

</mosaic_0001>

<llo_original>
// kernel: sinusoidal_positional_encoding.1
$region0: #{sinusoidal_positional_encoding.1}
  #allocation0 [shape = 'u32[]', space=smem, size = 0x4, offset = 0x4, fixed_abs, tag = 'smem constant byte address 0x4 - core index']
  #allocation1 [shape = 'u32[72,128]{1,0:T(1,128)}', space=vmem, size = 0x9000, scoped, tag = 'internal scratch']
  %s0 = inlined_call_operand.vmem [shape: f32[2,256], index: 0, kind: input, shape index: {}]
  %s1 = inlined_call_operand.vmem [shape: f32[1,2048], index: 1, kind: input, shape index: {}]
  %s2 = inlined_call_operand.vmem [shape: f32[2,256], index: 2, kind: output, shape index: {}]
  %s3 = sld [smem:[#allocation0]]
  $region18: #{sinusoidal_positional_encoding.1} parent=0
    _
  %s5 = ssub.s32 1, %s3
  %s6 = scalar_select 0, %s5, %s3
  // Predicated region
  $region2: #{sinusoidal_positional_encoding.1} parent=0 // pred_check
    _
  $region3: #{sinusoidal_positional_encoding.1} parent=0 // pred_check_branch
    %8 = sbr.rel (0) target = $region5
  $region4: #{sinusoidal_positional_encoding.1} parent=0 // pred_region
    _
  $region5: #{sinusoidal_positional_encoding.1} parent=0 // pred_fallthru
    _
  // Predicated region
  $region6: #{sinusoidal_positional_encoding.1} parent=0 // pred_check
    _
  $region7: #{sinusoidal_positional_encoding.1} parent=0 // pred_check_branch
    %10 = sbr.rel (0) target = $region9
  $region8: #{sinusoidal_positional_encoding.1} parent=0 // pred_region
    _
  $region9: #{sinusoidal_positional_encoding.1} parent=0 // pred_fallthru
    _
  %v11 = vld [vmem:[%s0] sm:$0xf]
  %v12 = vld [vmem:[%s1] sm:$0x3]
  %v14 = vperm.slane %v12, 0
  %v15 = vperm.slane %v12, 1
  %v16 = vrot.slane %v15, 6
  %vm17 = vcmask 1041408
  %v18 = vsel %vm17, %v14, %v16
  %v20 = vadd.f32 %v11, %v18
  %21 = vst [vmem:[%s2] sm:$0xf] %v20
  // Predicated region
  $region10: #{sinusoidal_positional_encoding.1} parent=0 // pred_check
    _
  $region11: #{sinusoidal_positional_encoding.1} parent=0 // pred_check_branch
    %23 = sbr.rel (0) target = $region13
  $region12: #{sinusoidal_positional_encoding.1} parent=0 // pred_region
    _
  $region13: #{sinusoidal_positional_encoding.1} parent=0 // pred_fallthru
    _
  // Predicated region
  $region14: #{sinusoidal_positional_encoding.1} parent=0 // pred_check
    _
  $region15: #{sinusoidal_positional_encoding.1} parent=0 // pred_check_branch
    %25 = sbr.rel (0) target = $region17
  $region16: #{sinusoidal_positional_encoding.1} parent=0 // pred_region
    _
  $region17: #{sinusoidal_positional_encoding.1} parent=0 // pred_fallthru
    _

</llo_original>
